<compile_context>
chip_gen: v6e
topology: v6e:2x2x1
jax: 0.10.0
libtpu: 0.0.40
codegen_flags: <defaults>
</compile_context>

<pallas_src>
import jax
import jax.numpy as jnp
from jax.experimental import pallas as pl
from jax.experimental.pallas import tpu as pltpu


# Offsets of each parameter inside the flat SMEM params vector (61 f32 total).
# Weights are stored (in_features, out_features) row-major, so w[k, j] is at
# OFFSET + k * out_features + j and the kernel computes y = x @ W + b
# (== PyTorch's x @ W.T with W of shape (out, in)).
_W1, _B1 = 0, 8          # w1: (2, 4), b1: (4,)
_W2, _B2 = 12, 44        # w2: (4, 8), b2: (8,)
_W3, _B3 = 52, 60        # w3: (8, 1), b3: (1,)
_N_PARAMS = 61


def mlp_kernel(params_ref, x_ref, o_ref):
    # params_ref: f32[61] in SMEM.
    # x_ref:      (2, R, 128) in VMEM -- feature k on axis 0, batch on (sublane, lane).
    # o_ref:      (R, 128)    in VMEM -- lane-dense output slab (unmasked stores).
    x = [x_ref[k] for k in range(2)]                       # each (R, 128)

    # fc1 + ReLU  (2 -> 4): unrolled VPU broadcast-MACs, scalar weights from SMEM.
    h1 = []
    for j in range(4):
        acc = params_ref[_W1 + 0 * 4 + j] * x[0]
        acc = acc + params_ref[_W1 + 1 * 4 + j] * x[1]
        acc = acc + params_ref[_B1 + j]
        h1.append(jnp.maximum(acc, 0.0))

    # fc2 + ReLU  (4 -> 8)
    h2 = []
    for j in range(8):
        acc = params_ref[_W2 + 0 * 8 + j] * h1[0]
        for k in range(1, 4):
            acc = acc + params_ref[_W2 + k * 8 + j] * h1[k]
        acc = acc + params_ref[_B2 + j]
        h2.append(jnp.maximum(acc, 0.0))

    # fc3 + sigmoid  (8 -> 1); sigmoid lowers to EUP exp/recip (separate VLIW slot).
    z = params_ref[_W3 + 0] * h2[0]
    for k in range(1, 8):
        z = z + params_ref[_W3 + k] * h2[k]
    z = z + params_ref[_B3]
    o_ref[...] = jax.nn.sigmoid(z)


def mlp_forward(x, w1, b1, w2, b2, w3, b3, *, tile_rows=2048):
    """x: (N, 2) f32.  Returns (N, 1) f32, matching the PyTorch module."""
    assert tile_rows % 1024 == 0, "tile_rows must be a multiple of 8*128"
    n = x.shape[0]
    n_pad = -(-n // tile_rows) * tile_rows
    r = tile_rows // 128
    n_blocks = n_pad // tile_rows

    # Layout plumbing (wrapper side): pad batch, put batch on (sublane, lane).
    x_pad = jnp.zeros((n_pad, 2), jnp.float32).at[:n, :].set(x.astype(jnp.float32))
    x_lanes = x_pad.T.reshape(2, n_pad // 128, 128)

    # Pack all weights + biases into one tiny flat SMEM vector.
    params = jnp.concatenate([
        w1.reshape(-1), b1.reshape(-1),
        w2.reshape(-1), b2.reshape(-1),
        w3.reshape(-1), b3.reshape(-1),
    ]).astype(jnp.float32)
    assert params.shape == (_N_PARAMS,)

    out = pl.pallas_call(
        mlp_kernel,
        out_shape=jax.ShapeDtypeStruct((n_pad // 128, 128), jnp.float32),
        grid=(n_blocks,),
        in_specs=[
            pl.BlockSpec(memory_space=pltpu.MemorySpace.SMEM),   # params (61 f32)
            pl.BlockSpec((2, r, 128), lambda i: (0, i, 0)),      # x slab per step
        ],
        out_specs=pl.BlockSpec((r, 128), lambda i: (i, 0)),
        compiler_params=pltpu.CompilerParams(
            dimension_semantics=("parallel",)),
    )(params, x_lanes)

    return out.reshape(n_pad)[:n].reshape(n, 1)


def init_params(key):
    # Deterministic init mimicking PyTorch Linear's U(-1/sqrt(fan_in), 1/sqrt(fan_in)).
    def linear(key, fan_in, fan_out):
        kw, kb = jax.random.split(key)
        bound = 1.0 / jnp.sqrt(fan_in)
        w = jax.random.uniform(kw, (fan_in, fan_out), jnp.float32, -bound, bound)
        b = jax.random.uniform(kb, (fan_out,), jnp.float32, -bound, bound)
        return w, b

    k1, k2, k3 = jax.random.split(key, 3)
    w1, b1 = linear(k1, 2, 4)
    w2, b2 = linear(k2, 4, 8)
    w3, b3 = linear(k3, 8, 1)
    return w1, b1, w2, b2, w3, b3


def _reference(x, w1, b1, w2, b2, w3, b3):
    h = jax.nn.relu(x @ w1 + b1)
    h = jax.nn.relu(h @ w2 + b2)
    return jax.nn.sigmoid(h @ w3 + b3)


if __name__ == "__main__":
    key = jax.random.PRNGKey(0)
    kx, kx2, kp = jax.random.split(key, 3)
    params = init_params(kp)

    # Small demo shape consistent with the module: batch of 8 rows of 2 features.
    batch = 8
    x = jax.random.normal(kx, (batch, 2), jnp.float32)
    out = jax.block_until_ready(mlp_forward(x, *params))
    ref = _reference(x, *params)
    assert out.shape == (batch, 1)
    assert jnp.allclose(out, ref, atol=1e-5), "mismatch vs reference (batch=8)"

    # Second check exercising a multi-block grid + remainder padding.
    batch2 = 4100
    x2 = jax.random.normal(kx2, (batch2, 2), jnp.float32)
    out2 = jax.block_until_ready(mlp_forward(x2, *params))
    ref2 = _reference(x2, *params)
    assert out2.shape == (batch2, 1)
    assert jnp.allclose(out2, ref2, atol=1e-5), "mismatch vs reference (batch=4100)"

    print("KERNEL_OK")
</pallas_src>

<mosaic_0001>
module attributes {stable_mosaic.version = 11 : i64} {
  func.func @mlp_kernel(%arg0: i32, %arg1: memref<61xf32, #tpu.memory_space<smem>>, %arg2: memref<2x16x128xf32, #tpu.memory_space<vmem>>, %arg3: memref<16x128xf32, #tpu.memory_space<vmem>>) attributes {dimension_semantics = [#tpu.dimension_semantics<parallel>], iteration_bounds = array<i64: 1>, scalar_prefetch = 0 : i64, scratch_operands = 0 : i64, tpu.core_type = #tpu.core_type<tc>, window_params = [{transform_indices = @transform_0, window_bounds = array<i64: 61>}, {transform_indices = @transform_1, window_bounds = array<i64: 2, 16, 128>}, {transform_indices = @transform_2, window_bounds = array<i64: 16, 128>}]} {
    %c0 = arith.constant 0 : index
    %c0_0 = arith.constant 0 : index
    %c0_1 = arith.constant 0 : index
    %0 = vector.load %arg2[%c0, %c0_0, %c0_1] : memref<2x16x128xf32, #tpu.memory_space<vmem>>, vector<1x16x128xf32>
    %1 = vector.shape_cast %0 : vector<1x16x128xf32> to vector<16x128xf32>
    %c1 = arith.constant 1 : index
    %c0_2 = arith.constant 0 : index
    %c0_3 = arith.constant 0 : index
    %2 = vector.load %arg2[%c1, %c0_2, %c0_3] : memref<2x16x128xf32, #tpu.memory_space<vmem>>, vector<1x16x128xf32>
    %3 = vector.shape_cast %2 : vector<1x16x128xf32> to vector<16x128xf32>
    %c0_4 = arith.constant 0 : index
    %4 = memref.load %arg1[%c0_4] : memref<61xf32, #tpu.memory_space<smem>>
    %5 = vector.broadcast %4 : f32 to vector<16x128xf32>
    %6 = arith.mulf %5, %1 : vector<16x128xf32>
    %c4 = arith.constant 4 : index
    %7 = memref.load %arg1[%c4] : memref<61xf32, #tpu.memory_space<smem>>
    %8 = vector.broadcast %7 : f32 to vector<16x128xf32>
    %9 = arith.mulf %8, %3 : vector<16x128xf32>
    %10 = arith.addf %6, %9 : vector<16x128xf32>
    %c8 = arith.constant 8 : index
    %11 = memref.load %arg1[%c8] : memref<61xf32, #tpu.memory_space<smem>>
    %12 = vector.broadcast %11 : f32 to vector<16x128xf32>
    %13 = arith.addf %10, %12 : vector<16x128xf32>
    %cst = arith.constant 0.000000e+00 : f32
    %14 = vector.broadcast %cst : f32 to vector<16x128xf32>
    %15 = arith.maximumf %13, %14 : vector<16x128xf32>
    %c1_5 = arith.constant 1 : index
    %16 = memref.load %arg1[%c1_5] : memref<61xf32, #tpu.memory_space<smem>>
    %17 = vector.broadcast %16 : f32 to vector<16x128xf32>
    %18 = arith.mulf %17, %1 : vector<16x128xf32>
    %c5 = arith.constant 5 : index
    %19 = memref.load %arg1[%c5] : memref<61xf32, #tpu.memory_space<smem>>
    %20 = vector.broadcast %19 : f32 to vector<16x128xf32>
    %21 = arith.mulf %20, %3 : vector<16x128xf32>
    %22 = arith.addf %18, %21 : vector<16x128xf32>
    %c9 = arith.constant 9 : index
    %23 = memref.load %arg1[%c9] : memref<61xf32, #tpu.memory_space<smem>>
    %24 = vector.broadcast %23 : f32 to vector<16x128xf32>
    %25 = arith.addf %22, %24 : vector<16x128xf32>
    %cst_6 = arith.constant 0.000000e+00 : f32
    %26 = vector.broadcast %cst_6 : f32 to vector<16x128xf32>
    %27 = arith.maximumf %25, %26 : vector<16x128xf32>
    %c2 = arith.constant 2 : index
    %28 = memref.load %arg1[%c2] : memref<61xf32, #tpu.memory_space<smem>>
    %29 = vector.broadcast %28 : f32 to vector<16x128xf32>
    %30 = arith.mulf %29, %1 : vector<16x128xf32>
    %c6 = arith.constant 6 : index
    %31 = memref.load %arg1[%c6] : memref<61xf32, #tpu.memory_space<smem>>
    %32 = vector.broadcast %31 : f32 to vector<16x128xf32>
    %33 = arith.mulf %32, %3 : vector<16x128xf32>
    %34 = arith.addf %30, %33 : vector<16x128xf32>
    %c10 = arith.constant 10 : index
    %35 = memref.load %arg1[%c10] : memref<61xf32, #tpu.memory_space<smem>>
    %36 = vector.broadcast %35 : f32 to vector<16x128xf32>
    %37 = arith.addf %34, %36 : vector<16x128xf32>
    %cst_7 = arith.constant 0.000000e+00 : f32
    %38 = vector.broadcast %cst_7 : f32 to vector<16x128xf32>
    %39 = arith.maximumf %37, %38 : vector<16x128xf32>
    %c3 = arith.constant 3 : index
    %40 = memref.load %arg1[%c3] : memref<61xf32, #tpu.memory_space<smem>>
    %41 = vector.broadcast %40 : f32 to vector<16x128xf32>
    %42 = arith.mulf %41, %1 : vector<16x128xf32>
    %c7 = arith.constant 7 : index
    %43 = memref.load %arg1[%c7] : memref<61xf32, #tpu.memory_space<smem>>
    %44 = vector.broadcast %43 : f32 to vector<16x128xf32>
    %45 = arith.mulf %44, %3 : vector<16x128xf32>
    %46 = arith.addf %42, %45 : vector<16x128xf32>
    %c11 = arith.constant 11 : index
    %47 = memref.load %arg1[%c11] : memref<61xf32, #tpu.memory_space<smem>>
    %48 = vector.broadcast %47 : f32 to vector<16x128xf32>
    %49 = arith.addf %46, %48 : vector<16x128xf32>
    %cst_8 = arith.constant 0.000000e+00 : f32
    %50 = vector.broadcast %cst_8 : f32 to vector<16x128xf32>
    %51 = arith.maximumf %49, %50 : vector<16x128xf32>
    %c12 = arith.constant 12 : index
    %52 = memref.load %arg1[%c12] : memref<61xf32, #tpu.memory_space<smem>>
    %53 = vector.broadcast %52 : f32 to vector<16x128xf32>
    %54 = arith.mulf %53, %15 : vector<16x128xf32>
    %c20 = arith.constant 20 : index
    %55 = memref.load %arg1[%c20] : memref<61xf32, #tpu.memory_space<smem>>
    %56 = vector.broadcast %55 : f32 to vector<16x128xf32>
    %57 = arith.mulf %56, %27 : vector<16x128xf32>
    %58 = arith.addf %54, %57 : vector<16x128xf32>
    %c28 = arith.constant 28 : index
    %59 = memref.load %arg1[%c28] : memref<61xf32, #tpu.memory_space<smem>>
    %60 = vector.broadcast %59 : f32 to vector<16x128xf32>
    %61 = arith.mulf %60, %39 : vector<16x128xf32>
    %62 = arith.addf %58, %61 : vector<16x128xf32>
    %c36 = arith.constant 36 : index
    %63 = memref.load %arg1[%c36] : memref<61xf32, #tpu.memory_space<smem>>
    %64 = vector.broadcast %63 : f32 to vector<16x128xf32>
    %65 = arith.mulf %64, %51 : vector<16x128xf32>
    %66 = arith.addf %62, %65 : vector<16x128xf32>
    %c44 = arith.constant 44 : index
    %67 = memref.load %arg1[%c44] : memref<61xf32, #tpu.memory_space<smem>>
    %68 = vector.broadcast %67 : f32 to vector<16x128xf32>
    %69 = arith.addf %66, %68 : vector<16x128xf32>
    %cst_9 = arith.constant 0.000000e+00 : f32
    %70 = vector.broadcast %cst_9 : f32 to vector<16x128xf32>
    %71 = arith.maximumf %69, %70 : vector<16x128xf32>
    %c13 = arith.constant 13 : index
    %72 = memref.load %arg1[%c13] : memref<61xf32, #tpu.memory_space<smem>>
    %73 = vector.broadcast %72 : f32 to vector<16x128xf32>
    %74 = arith.mulf %73, %15 : vector<16x128xf32>
    %c21 = arith.constant 21 : index
    %75 = memref.load %arg1[%c21] : memref<61xf32, #tpu.memory_space<smem>>
    %76 = vector.broadcast %75 : f32 to vector<16x128xf32>
    %77 = arith.mulf %76, %27 : vector<16x128xf32>
    %78 = arith.addf %74, %77 : vector<16x128xf32>
    %c29 = arith.constant 29 : index
    %79 = memref.load %arg1[%c29] : memref<61xf32, #tpu.memory_space<smem>>
    %80 = vector.broadcast %79 : f32 to vector<16x128xf32>
    %81 = arith.mulf %80, %39 : vector<16x128xf32>
    %82 = arith.addf %78, %81 : vector<16x128xf32>
    %c37 = arith.constant 37 : index
    %83 = memref.load %arg1[%c37] : memref<61xf32, #tpu.memory_space<smem>>
    %84 = vector.broadcast %83 : f32 to vector<16x128xf32>
    %85 = arith.mulf %84, %51 : vector<16x128xf32>
    %86 = arith.addf %82, %85 : vector<16x128xf32>
    %c45 = arith.constant 45 : index
    %87 = memref.load %arg1[%c45] : memref<61xf32, #tpu.memory_space<smem>>
    %88 = vector.broadcast %87 : f32 to vector<16x128xf32>
    %89 = arith.addf %86, %88 : vector<16x128xf32>
    %cst_10 = arith.constant 0.000000e+00 : f32
    %90 = vector.broadcast %cst_10 : f32 to vector<16x128xf32>
    %91 = arith.maximumf %89, %90 : vector<16x128xf32>
    %c14 = arith.constant 14 : index
    %92 = memref.load %arg1[%c14] : memref<61xf32, #tpu.memory_space<smem>>
    %93 = vector.broadcast %92 : f32 to vector<16x128xf32>
    %94 = arith.mulf %93, %15 : vector<16x128xf32>
    %c22 = arith.constant 22 : index
    %95 = memref.load %arg1[%c22] : memref<61xf32, #tpu.memory_space<smem>>
    %96 = vector.broadcast %95 : f32 to vector<16x128xf32>
    %97 = arith.mulf %96, %27 : vector<16x128xf32>
    %98 = arith.addf %94, %97 : vector<16x128xf32>
    %c30 = arith.constant 30 : index
    %99 = memref.load %arg1[%c30] : memref<61xf32, #tpu.memory_space<smem>>
    %100 = vector.broadcast %99 : f32 to vector<16x128xf32>
    %101 = arith.mulf %100, %39 : vector<16x128xf32>
    %102 = arith.addf %98, %101 : vector<16x128xf32>
    %c38 = arith.constant 38 : index
    %103 = memref.load %arg1[%c38] : memref<61xf32, #tpu.memory_space<smem>>
    %104 = vector.broadcast %103 : f32 to vector<16x128xf32>
    %105 = arith.mulf %104, %51 : vector<16x128xf32>
    %106 = arith.addf %102, %105 : vector<16x128xf32>
    %c46 = arith.constant 46 : index
    %107 = memref.load %arg1[%c46] : memref<61xf32, #tpu.memory_space<smem>>
    %108 = vector.broadcast %107 : f32 to vector<16x128xf32>
    %109 = arith.addf %106, %108 : vector<16x128xf32>
    %cst_11 = arith.constant 0.000000e+00 : f32
    %110 = vector.broadcast %cst_11 : f32 to vector<16x128xf32>
    %111 = arith.maximumf %109, %110 : vector<16x128xf32>
    %c15 = arith.constant 15 : index
    %112 = memref.load %arg1[%c15] : memref<61xf32, #tpu.memory_space<smem>>
    %113 = vector.broadcast %112 : f32 to vector<16x128xf32>
    %114 = arith.mulf %113, %15 : vector<16x128xf32>
    %c23 = arith.constant 23 : index
    %115 = memref.load %arg1[%c23] : memref<61xf32, #tpu.memory_space<smem>>
    %116 = vector.broadcast %115 : f32 to vector<16x128xf32>
    %117 = arith.mulf %116, %27 : vector<16x128xf32>
    %118 = arith.addf %114, %117 : vector<16x128xf32>
    %c31 = arith.constant 31 : index
    %119 = memref.load %arg1[%c31] : memref<61xf32, #tpu.memory_space<smem>>
    %120 = vector.broadcast %119 : f32 to vector<16x128xf32>
    %121 = arith.mulf %120, %39 : vector<16x128xf32>
    %122 = arith.addf %118, %121 : vector<16x128xf32>
    %c39 = arith.constant 39 : index
    %123 = memref.load %arg1[%c39] : memref<61xf32, #tpu.memory_space<smem>>
    %124 = vector.broadcast %123 : f32 to vector<16x128xf32>
    %125 = arith.mulf %124, %51 : vector<16x128xf32>
    %126 = arith.addf %122, %125 : vector<16x128xf32>
    %c47 = arith.constant 47 : index
    %127 = memref.load %arg1[%c47] : memref<61xf32, #tpu.memory_space<smem>>
    %128 = vector.broadcast %127 : f32 to vector<16x128xf32>
    %129 = arith.addf %126, %128 : vector<16x128xf32>
    %cst_12 = arith.constant 0.000000e+00 : f32
    %130 = vector.broadcast %cst_12 : f32 to vector<16x128xf32>
    %131 = arith.maximumf %129, %130 : vector<16x128xf32>
    %c16 = arith.constant 16 : index
    %132 = memref.load %arg1[%c16] : memref<61xf32, #tpu.memory_space<smem>>
    %133 = vector.broadcast %132 : f32 to vector<16x128xf32>
    %134 = arith.mulf %133, %15 : vector<16x128xf32>
    %c24 = arith.constant 24 : index
    %135 = memref.load %arg1[%c24] : memref<61xf32, #tpu.memory_space<smem>>
    %136 = vector.broadcast %135 : f32 to vector<16x128xf32>
    %137 = arith.mulf %136, %27 : vector<16x128xf32>
    %138 = arith.addf %134, %137 : vector<16x128xf32>
    %c32 = arith.constant 32 : index
    %139 = memref.load %arg1[%c32] : memref<61xf32, #tpu.memory_space<smem>>
    %140 = vector.broadcast %139 : f32 to vector<16x128xf32>
    %141 = arith.mulf %140, %39 : vector<16x128xf32>
    %142 = arith.addf %138, %141 : vector<16x128xf32>
    %c40 = arith.constant 40 : index
    %143 = memref.load %arg1[%c40] : memref<61xf32, #tpu.memory_space<smem>>
    %144 = vector.broadcast %143 : f32 to vector<16x128xf32>
    %145 = arith.mulf %144, %51 : vector<16x128xf32>
    %146 = arith.addf %142, %145 : vector<16x128xf32>
    %c48 = arith.constant 48 : index
    %147 = memref.load %arg1[%c48] : memref<61xf32, #tpu.memory_space<smem>>
    %148 = vector.broadcast %147 : f32 to vector<16x128xf32>
    %149 = arith.addf %146, %148 : vector<16x128xf32>
    %cst_13 = arith.constant 0.000000e+00 : f32
    %150 = vector.broadcast %cst_13 : f32 to vector<16x128xf32>
    %151 = arith.maximumf %149, %150 : vector<16x128xf32>
    %c17 = arith.constant 17 : index
    %152 = memref.load %arg1[%c17] : memref<61xf32, #tpu.memory_space<smem>>
    %153 = vector.broadcast %152 : f32 to vector<16x128xf32>
    %154 = arith.mulf %153, %15 : vector<16x128xf32>
    %c25 = arith.constant 25 : index
    %155 = memref.load %arg1[%c25] : memref<61xf32, #tpu.memory_space<smem>>
    %156 = vector.broadcast %155 : f32 to vector<16x128xf32>
    %157 = arith.mulf %156, %27 : vector<16x128xf32>
    %158 = arith.addf %154, %157 : vector<16x128xf32>
    %c33 = arith.constant 33 : index
    %159 = memref.load %arg1[%c33] : memref<61xf32, #tpu.memory_space<smem>>
    %160 = vector.broadcast %159 : f32 to vector<16x128xf32>
    %161 = arith.mulf %160, %39 : vector<16x128xf32>
    %162 = arith.addf %158, %161 : vector<16x128xf32>
    %c41 = arith.constant 41 : index
    %163 = memref.load %arg1[%c41] : memref<61xf32, #tpu.memory_space<smem>>
    %164 = vector.broadcast %163 : f32 to vector<16x128xf32>
    %165 = arith.mulf %164, %51 : vector<16x128xf32>
    %166 = arith.addf %162, %165 : vector<16x128xf32>
    %c49 = arith.constant 49 : index
    %167 = memref.load %arg1[%c49] : memref<61xf32, #tpu.memory_space<smem>>
    %168 = vector.broadcast %167 : f32 to vector<16x128xf32>
    %169 = arith.addf %166, %168 : vector<16x128xf32>
    %cst_14 = arith.constant 0.000000e+00 : f32
    %170 = vector.broadcast %cst_14 : f32 to vector<16x128xf32>
    %171 = arith.maximumf %169, %170 : vector<16x128xf32>
    %c18 = arith.constant 18 : index
    %172 = memref.load %arg1[%c18] : memref<61xf32, #tpu.memory_space<smem>>
    %173 = vector.broadcast %172 : f32 to vector<16x128xf32>
    %174 = arith.mulf %173, %15 : vector<16x128xf32>
    %c26 = arith.constant 26 : index
    %175 = memref.load %arg1[%c26] : memref<61xf32, #tpu.memory_space<smem>>
    %176 = vector.broadcast %175 : f32 to vector<16x128xf32>
    %177 = arith.mulf %176, %27 : vector<16x128xf32>
    %178 = arith.addf %174, %177 : vector<16x128xf32>
    %c34 = arith.constant 34 : index
    %179 = memref.load %arg1[%c34] : memref<61xf32, #tpu.memory_space<smem>>
    %180 = vector.broadcast %179 : f32 to vector<16x128xf32>
    %181 = arith.mulf %180, %39 : vector<16x128xf32>
    %182 = arith.addf %178, %181 : vector<16x128xf32>
    %c42 = arith.constant 42 : index
    %183 = memref.load %arg1[%c42] : memref<61xf32, #tpu.memory_space<smem>>
    %184 = vector.broadcast %183 : f32 to vector<16x128xf32>
    %185 = arith.mulf %184, %51 : vector<16x128xf32>
    %186 = arith.addf %182, %185 : vector<16x128xf32>
    %c50 = arith.constant 50 : index
    %187 = memref.load %arg1[%c50] : memref<61xf32, #tpu.memory_space<smem>>
    %188 = vector.broadcast %187 : f32 to vector<16x128xf32>
    %189 = arith.addf %186, %188 : vector<16x128xf32>
    %cst_15 = arith.constant 0.000000e+00 : f32
    %190 = vector.broadcast %cst_15 : f32 to vector<16x128xf32>
    %191 = arith.maximumf %189, %190 : vector<16x128xf32>
    %c19 = arith.constant 19 : index
    %192 = memref.load %arg1[%c19] : memref<61xf32, #tpu.memory_space<smem>>
    %193 = vector.broadcast %192 : f32 to vector<16x128xf32>
    %194 = arith.mulf %193, %15 : vector<16x128xf32>
    %c27 = arith.constant 27 : index
    %195 = memref.load %arg1[%c27] : memref<61xf32, #tpu.memory_space<smem>>
    %196 = vector.broadcast %195 : f32 to vector<16x128xf32>
    %197 = arith.mulf %196, %27 : vector<16x128xf32>
    %198 = arith.addf %194, %197 : vector<16x128xf32>
    %c35 = arith.constant 35 : index
    %199 = memref.load %arg1[%c35] : memref<61xf32, #tpu.memory_space<smem>>
    %200 = vector.broadcast %199 : f32 to vector<16x128xf32>
    %201 = arith.mulf %200, %39 : vector<16x128xf32>
    %202 = arith.addf %198, %201 : vector<16x128xf32>
    %c43 = arith.constant 43 : index
    %203 = memref.load %arg1[%c43] : memref<61xf32, #tpu.memory_space<smem>>
    %204 = vector.broadcast %203 : f32 to vector<16x128xf32>
    %205 = arith.mulf %204, %51 : vector<16x128xf32>
    %206 = arith.addf %202, %205 : vector<16x128xf32>
    %c51 = arith.constant 51 : index
    %207 = memref.load %arg1[%c51] : memref<61xf32, #tpu.memory_space<smem>>
    %208 = vector.broadcast %207 : f32 to vector<16x128xf32>
    %209 = arith.addf %206, %208 : vector<16x128xf32>
    %cst_16 = arith.constant 0.000000e+00 : f32
    %210 = vector.broadcast %cst_16 : f32 to vector<16x128xf32>
    %211 = arith.maximumf %209, %210 : vector<16x128xf32>
    %c52 = arith.constant 52 : index
    %212 = memref.load %arg1[%c52] : memref<61xf32, #tpu.memory_space<smem>>
    %213 = vector.broadcast %212 : f32 to vector<16x128xf32>
    %214 = arith.mulf %213, %71 : vector<16x128xf32>
    %c53 = arith.constant 53 : index
    %215 = memref.load %arg1[%c53] : memref<61xf32, #tpu.memory_space<smem>>
    %216 = vector.broadcast %215 : f32 to vector<16x128xf32>
    %217 = arith.mulf %216, %91 : vector<16x128xf32>
    %218 = arith.addf %214, %217 : vector<16x128xf32>
    %c54 = arith.constant 54 : index
    %219 = memref.load %arg1[%c54] : memref<61xf32, #tpu.memory_space<smem>>
    %220 = vector.broadcast %219 : f32 to vector<16x128xf32>
    %221 = arith.mulf %220, %111 : vector<16x128xf32>
    %222 = arith.addf %218, %221 : vector<16x128xf32>
    %c55 = arith.constant 55 : index
    %223 = memref.load %arg1[%c55] : memref<61xf32, #tpu.memory_space<smem>>
    %224 = vector.broadcast %223 : f32 to vector<16x128xf32>
    %225 = arith.mulf %224, %131 : vector<16x128xf32>
    %226 = arith.addf %222, %225 : vector<16x128xf32>
    %c56 = arith.constant 56 : index
    %227 = memref.load %arg1[%c56] : memref<61xf32, #tpu.memory_space<smem>>
    %228 = vector.broadcast %227 : f32 to vector<16x128xf32>
    %229 = arith.mulf %228, %151 : vector<16x128xf32>
    %230 = arith.addf %226, %229 : vector<16x128xf32>
    %c57 = arith.constant 57 : index
    %231 = memref.load %arg1[%c57] : memref<61xf32, #tpu.memory_space<smem>>
    %232 = vector.broadcast %231 : f32 to vector<16x128xf32>
    %233 = arith.mulf %232, %171 : vector<16x128xf32>
    %234 = arith.addf %230, %233 : vector<16x128xf32>
    %c58 = arith.constant 58 : index
    %235 = memref.load %arg1[%c58] : memref<61xf32, #tpu.memory_space<smem>>
    %236 = vector.broadcast %235 : f32 to vector<16x128xf32>
    %237 = arith.mulf %236, %191 : vector<16x128xf32>
    %238 = arith.addf %234, %237 : vector<16x128xf32>
    %c59 = arith.constant 59 : index
    %239 = memref.load %arg1[%c59] : memref<61xf32, #tpu.memory_space<smem>>
    %240 = vector.broadcast %239 : f32 to vector<16x128xf32>
    %241 = arith.mulf %240, %211 : vector<16x128xf32>
    %242 = arith.addf %238, %241 : vector<16x128xf32>
    %c60 = arith.constant 60 : index
    %243 = memref.load %arg1[%c60] : memref<61xf32, #tpu.memory_space<smem>>
    %244 = vector.broadcast %243 : f32 to vector<16x128xf32>
    %245 = arith.addf %242, %244 : vector<16x128xf32>
    %246 = arith.negf %245 : vector<16x128xf32>
    %247 = math.exp %246 : vector<16x128xf32>
    %cst_17 = arith.constant 1.000000e+00 : f32
    %248 = vector.broadcast %cst_17 : f32 to vector<16x128xf32>
    %249 = arith.addf %248, %247 : vector<16x128xf32>
    %250 = arith.divf %248, %249 : vector<16x128xf32>
    %c0_18 = arith.constant 0 : index
    %c0_19 = arith.constant 0 : index
    %251 = vector.load %arg3[%c0_18, %c0_19] : memref<16x128xf32, #tpu.memory_space<vmem>>, vector<16x128xf32>
    tpu.vector_store %arg3[%c0_18, %c0_19], %250 {strides = array<i32>} : memref<16x128xf32, #tpu.memory_space<vmem>>, vector<16x128xf32>,
    return
  }
  func.func @transform_0(%arg0: i32) -> i32 {
    %c0_i32 = arith.constant 0 : i32
    %c0_i32_0 = arith.constant 0 : i32
    return %c0_i32 : i32
  }
  func.func @transform_1(%arg0: i32) -> (i32, i32, i32) {
    %c0_i32 = arith.constant 0 : i32
    %c0_i32_0 = arith.constant 0 : i32
    %c0_i32_1 = arith.constant 0 : i32
    return %c0_i32, %arg0, %c0_i32_0 : i32, i32, i32
  }
  func.func @transform_2(%arg0: i32) -> (i32, i32) {
    %c0_i32 = arith.constant 0 : i32
    %c0_i32_0 = arith.constant 0 : i32
    return %arg0, %c0_i32 : i32, i32
  }
}

</mosaic_0001>

<llo_original>
// kernel: tpu_custom_call.1
$region0: #{tpu_custom_call.1}
  #allocation0 [shape = 'u32[]', space=smem, size = 0x4, offset = 0x4, fixed_abs, tag = 'smem constant byte address 0x4 - core index']
  #allocation1 [shape = 'u32[144,128]{1,0:T(1,128)}', space=vmem, size = 0x12000, scoped, tag = 'internal scratch']
  %s0 = inlined_call_operand.hbm [shape: f32[61], index: 0, kind: input, shape index: {}]
  %s1 = inlined_call_operand.hbm [shape: f32[2,16,128], index: 1, kind: input, shape index: {}]
  %s2 = inlined_call_operand.hbm [shape: f32[16,128], index: 2, kind: output, shape index: {}]
  %s3 = sld [smem:[#allocation0]]
  $region26: #{tpu_custom_call.1} parent=0
    _
  %s5 = ssub.s32 1, %s3
  %s6 = scalar_select 0, %s5, %s3
  $region1: #{tpu_custom_call.1} parent=0
    #allocation2 [shape = 'u8[512]{0}', space=smem, size = 0x200, scoped, tag = 'input window, operand 0, single buffered']
    #allocation3 [shape = 's32[1]{0}', space=sflag, size = 0x4, scoped, tag = 'scoped memory for tpu_custom_call.1']
    #allocation4 [shape = 's32[1]{0}', space=sflag, size = 0x4, scoped, tag = 'scoped memory for tpu_custom_call.1']
    #allocation5 [shape = 's32[1]{0}', space=sflag, size = 0x4, scoped, tag = 'scoped memory for tpu_custom_call.1']
    #allocation6 [shape = 'u8[16384]{0}', space=vmem, size = 0x4000, scoped, tag = 'input window, operand 1, single buffered']
    #allocation7 [shape = 'u8[8192]{0}', space=vmem, size = 0x2000, scoped, tag = 'output window, operand 0, single buffered']
    %7 = vsyncpa [#allocation5], 0
    %8 = vsyncpa [#allocation3], 0
    %9 = vsyncpa [#allocation4], 0
    // Predicated region
    $region2: #{tpu_custom_call.1} parent=1 // pred_check
      _
    $region3: #{tpu_custom_call.1} parent=1 // pred_check_branch
      %11 = sbr.rel (0) target = $region5
    $region4: #{tpu_custom_call.1} parent=1 // pred_region
      %s13 = ssub.s32 16, 16
      %14 = vsyncadd [#allocation5], %s13
      %17 = dma.hbm_to_smem %s0, 16, [#allocation2], [#allocation5]
    $region5: #{tpu_custom_call.1} parent=1 // pred_fallthru
      _
    // Predicated region
    $region6: #{tpu_custom_call.1} parent=1 // pred_check
      _
    $region7: #{tpu_custom_call.1} parent=1 // pred_check_branch
      %19 = sbr.rel (0) target = $region9
    $region8: #{tpu_custom_call.1} parent=1 // pred_region
      %s21 = ssub.s32 512, 512
      %22 = vsyncadd [#allocation3], %s21
      %s23 = sshll.u32 [#allocation6], 4
      %s24 = int_to_ptr.vmem [resolvable:$true] %s23
      %29 = dma.hbm_to_vmem [thread:$0]  %s1, 512, %s24, [#allocation3], 128, 128, 8
    $region9: #{tpu_custom_call.1} parent=1 // pred_fallthru
      _
    // Predicated region
    $region10: #{tpu_custom_call.1} parent=1 // pred_check
      _
    $region11: #{tpu_custom_call.1} parent=1 // pred_check_branch
      %31 = sbr.rel (0) target = $region13
    $region12: #{tpu_custom_call.1} parent=1 // pred_region
      %32 = dma.done [#allocation5], 16
    $region13: #{tpu_custom_call.1} parent=1 // pred_fallthru
      _
    // Predicated region
    $region14: #{tpu_custom_call.1} parent=1 // pred_check
      _
    $region15: #{tpu_custom_call.1} parent=1 // pred_check_branch
      %34 = sbr.rel (0) target = $region17
    $region16: #{tpu_custom_call.1} parent=1 // pred_region
      %35 = dma.done [#allocation3], 512
    $region17: #{tpu_custom_call.1} parent=1 // pred_fallthru
      _
    %36 = sfence
    %v37 = vld [vmem:[#allocation6] sm:$0xff]
    %v38 = vld [vmem:[#allocation6 + $0x8] sm:$0xff]
    %s39 = scalar_lea.vmem [#allocation6], 16
    %v40 = vld [vmem:[%s39] sm:$0xff]
    %v41 = vld [vmem:[%s39 + $0x8] sm:$0xff]
    %s42 = sld [smem:[#allocation2]]
    %v43 = vstv %s42
    %v44 = vmul.f32 %v43, %v37
    %v45 = vmul.f32 %v43, %v38
    %s46 = sld [smem:[#allocation2 + $0x4]]
    %v47 = vstv %s46
    %v48 = vmul.f32 %v47, %v40
    %v49 = vmul.f32 %v47, %v41
    %v50 = vadd.f32 %v44, %v48
    %v51 = vadd.f32 %v45, %v49
    %s52 = sld [smem:[#allocation2 + $0x8]]
    %v53 = vstv %s52
    %v54 = vadd.f32 %v50, %v53
    %v55 = vadd.f32 %v51, %v53
    %v56 = vmax.f32 %v54, 0.0
    %v57 = vmax.f32 %v55, 0.0
    %s58 = sld [smem:[#allocation2 + $0x1]]
    %v59 = vstv %s58
    %v60 = vmul.f32 %v59, %v37
    %v61 = vmul.f32 %v59, %v38
    %s62 = sld [smem:[#allocation2 + $0x5]]
    %v63 = vstv %s62
    %v64 = vmul.f32 %v63, %v40
    %v65 = vmul.f32 %v63, %v41
    %v66 = vadd.f32 %v60, %v64
    %v67 = vadd.f32 %v61, %v65
    %s68 = sld [smem:[#allocation2 + $0x9]]
    %v69 = vstv %s68
    %v70 = vadd.f32 %v66, %v69
    %v71 = vadd.f32 %v67, %v69
    %v72 = vmax.f32 %v70, 0.0
    %v73 = vmax.f32 %v71, 0.0
    %s74 = sld [smem:[#allocation2 + $0x2]]
    %v75 = vstv %s74
    %v76 = vmul.f32 %v75, %v37
    %v77 = vmul.f32 %v75, %v38
    %s78 = sld [smem:[#allocation2 + $0x6]]
    %v79 = vstv %s78
    %v80 = vmul.f32 %v79, %v40
    %v81 = vmul.f32 %v79, %v41
    %v82 = vadd.f32 %v76, %v80
    %v83 = vadd.f32 %v77, %v81
    %s84 = sld [smem:[#allocation2 + $0xa]]
    %v85 = vstv %s84
    %v86 = vadd.f32 %v82, %v85
    %v87 = vadd.f32 %v83, %v85
    %v88 = vmax.f32 %v86, 0.0
    %v89 = vmax.f32 %v87, 0.0
    %s90 = sld [smem:[#allocation2 + $0x3]]
    %v91 = vstv %s90
    %v92 = vmul.f32 %v91, %v37
    %v93 = vmul.f32 %v91, %v38
    %s94 = sld [smem:[#allocation2 + $0x7]]
    %v95 = vstv %s94
    %v96 = vmul.f32 %v95, %v40
    %v97 = vmul.f32 %v95, %v41
    %v98 = vadd.f32 %v92, %v96
    %v99 = vadd.f32 %v93, %v97
    %s100 = sld [smem:[#allocation2 + $0xb]]
    %v101 = vstv %s100
    %v102 = vadd.f32 %v98, %v101
    %v103 = vadd.f32 %v99, %v101
    %v104 = vmax.f32 %v102, 0.0
    %v105 = vmax.f32 %v103, 0.0
    %s106 = sld [smem:[#allocation2 + $0xc]]
    %v107 = vstv %s106
    %v108 = vmul.f32 %v107, %v56
    %v109 = vmul.f32 %v107, %v57
    %s110 = sld [smem:[#allocation2 + $0x14]]
    %v111 = vstv %s110
    %v112 = vmul.f32 %v111, %v72
    %v113 = vmul.f32 %v111, %v73
    %v114 = vadd.f32 %v108, %v112
    %v115 = vadd.f32 %v109, %v113
    %s116 = sld [smem:[#allocation2 + $0x1c]]
    %v117 = vstv %s116
    %v118 = vmul.f32 %v117, %v88
    %v119 = vmul.f32 %v117, %v89
    %v120 = vadd.f32 %v114, %v118
    %v121 = vadd.f32 %v115, %v119
    %s122 = sld [smem:[#allocation2 + $0x24]]
    %v123 = vstv %s122
    %v124 = vmul.f32 %v123, %v104
    %v125 = vmul.f32 %v123, %v105
    %v126 = vadd.f32 %v120, %v124
    %v127 = vadd.f32 %v121, %v125
    %s128 = sld [smem:[#allocation2 + $0x2c]]
    %v129 = vstv %s128
    %v130 = vadd.f32 %v126, %v129
    %v131 = vadd.f32 %v127, %v129
    %v132 = vmax.f32 %v130, 0.0
    %v133 = vmax.f32 %v131, 0.0
    %s134 = sld [smem:[#allocation2 + $0xd]]
    %v135 = vstv %s134
    %v136 = vmul.f32 %v135, %v56
    %v137 = vmul.f32 %v135, %v57
    %s138 = sld [smem:[#allocation2 + $0x15]]
    %v139 = vstv %s138
    %v140 = vmul.f32 %v139, %v72
    %v141 = vmul.f32 %v139, %v73
    %v142 = vadd.f32 %v136, %v140
    %v143 = vadd.f32 %v137, %v141
    %s144 = sld [smem:[#allocation2 + $0x1d]]
    %v145 = vstv %s144
    %v146 = vmul.f32 %v145, %v88
    %v147 = vmul.f32 %v145, %v89
    %v148 = vadd.f32 %v142, %v146
    %v149 = vadd.f32 %v143, %v147
    %s150 = sld [smem:[#allocation2 + $0x25]]
    %v151 = vstv %s150
    %v152 = vmul.f32 %v151, %v104
    %v153 = vmul.f32 %v151, %v105
    %v154 = vadd.f32 %v148, %v152
    %v155 = vadd.f32 %v149, %v153
    %s156 = sld [smem:[#allocation2 + $0x2d]]
    %v157 = vstv %s156
    %v158 = vadd.f32 %v154, %v157
    %v159 = vadd.f32 %v155, %v157
    %v160 = vmax.f32 %v158, 0.0
    %v161 = vmax.f32 %v159, 0.0
    %s162 = sld [smem:[#allocation2 + $0xe]]
    %v163 = vstv %s162
    %v164 = vmul.f32 %v163, %v56
    %v165 = vmul.f32 %v163, %v57
    %s166 = sld [smem:[#allocation2 + $0x16]]
    %v167 = vstv %s166
    %v168 = vmul.f32 %v167, %v72
    %v169 = vmul.f32 %v167, %v73
    %v170 = vadd.f32 %v164, %v168
    %v171 = vadd.f32 %v165, %v169
    %s172 = sld [smem:[#allocation2 + $0x1e]]
    %v173 = vstv %s172
    %v174 = vmul.f32 %v173, %v88
    %v175 = vmul.f32 %v173, %v89
    %v176 = vadd.f32 %v170, %v174
    %v177 = vadd.f32 %v171, %v175
    %s178 = sld [smem:[#allocation2 + $0x26]]
    %v179 = vstv %s178
    %v180 = vmul.f32 %v179, %v104
    %v181 = vmul.f32 %v179, %v105
    %v182 = vadd.f32 %v176, %v180
    %v183 = vadd.f32 %v177, %v181
    %s184 = sld [smem:[#allocation2 + $0x2e]]
    %v185 = vstv %s184
    %v186 = vadd.f32 %v182, %v185
    %v187 = vadd.f32 %v183, %v185
    %v188 = vmax.f32 %v186, 0.0
    %v189 = vmax.f32 %v187, 0.0
    %s190 = sld [smem:[#allocation2 + $0xf]]
    %v191 = vstv %s190
    %v192 = vmul.f32 %v191, %v56
    %v193 = vmul.f32 %v191, %v57
    %s194 = sld [smem:[#allocation2 + $0x17]]
    %v195 = vstv %s194
    %v196 = vmul.f32 %v195, %v72
    %v197 = vmul.f32 %v195, %v73
    %v198 = vadd.f32 %v192, %v196
    %v199 = vadd.f32 %v193, %v197
    %s200 = sld [smem:[#allocation2 + $0x1f]]
    %v201 = vstv %s200
    %v202 = vmul.f32 %v201, %v88
    %v203 = vmul.f32 %v201, %v89
    %v204 = vadd.f32 %v198, %v202
    %v205 = vadd.f32 %v199, %v203
    %s206 = sld [smem:[#allocation2 + $0x27]]
    %v207 = vstv %s206
    %v208 = vmul.f32 %v207, %v104
    %v209 = vmul.f32 %v207, %v105
    %v210 = vadd.f32 %v204, %v208
    %v211 = vadd.f32 %v205, %v209
    %s212 = sld [smem:[#allocation2 + $0x2f]]
    %v213 = vstv %s212
    %v214 = vadd.f32 %v210, %v213
    %v215 = vadd.f32 %v211, %v213
    %v216 = vmax.f32 %v214, 0.0
    %v217 = vmax.f32 %v215, 0.0
    %s218 = sld [smem:[#allocation2 + $0x10]]
    %v219 = vstv %s218
    %v220 = vmul.f32 %v219, %v56
    %v221 = vmul.f32 %v219, %v57
    %s222 = sld [smem:[#allocation2 + $0x18]]
    %v223 = vstv %s222
    %v224 = vmul.f32 %v223, %v72
    %v225 = vmul.f32 %v223, %v73
    %v226 = vadd.f32 %v220, %v224
    %v227 = vadd.f32 %v221, %v225
    %s228 = sld [smem:[#allocation2 + $0x20]]
    %v229 = vstv %s228
    %v230 = vmul.f32 %v229, %v88
    %v231 = vmul.f32 %v229, %v89
    %v232 = vadd.f32 %v226, %v230
    %v233 = vadd.f32 %v227, %v231
    %s234 = sld [smem:[#allocation2 + $0x28]]
    %v235 = vstv %s234
    %v236 = vmul.f32 %v235, %v104
    %v237 = vmul.f32 %v235, %v105
    %v238 = vadd.f32 %v232, %v236
    %v239 = vadd.f32 %v233, %v237
    %s240 = sld [smem:[#allocation2 + $0x30]]
    %v241 = vstv %s240
    %v242 = vadd.f32 %v238, %v241
    %v243 = vadd.f32 %v239, %v241
    %v244 = vmax.f32 %v242, 0.0
    %v245 = vmax.f32 %v243, 0.0
    %s246 = sld [smem:[#allocation2 + $0x11]]
    %v247 = vstv %s246
    %v248 = vmul.f32 %v247, %v56
    %v249 = vmul.f32 %v247, %v57
    %s250 = sld [smem:[#allocation2 + $0x19]]
    %v251 = vstv %s250
    %v252 = vmul.f32 %v251, %v72
    %v253 = vmul.f32 %v251, %v73
    %v254 = vadd.f32 %v248, %v252
    %v255 = vadd.f32 %v249, %v253
    %s256 = sld [smem:[#allocation2 + $0x21]]
    %v257 = vstv %s256
    %v258 = vmul.f32 %v257, %v88
    %v259 = vmul.f32 %v257, %v89
    %v260 = vadd.f32 %v254, %v258
    %v261 = vadd.f32 %v255, %v259
    %s262 = sld [smem:[#allocation2 + $0x29]]
    %v263 = vstv %s262
    %v264 = vmul.f32 %v263, %v104
    %v265 = vmul.f32 %v263, %v105
    %v266 = vadd.f32 %v260, %v264
    %v267 = vadd.f32 %v261, %v265
    %s268 = sld [smem:[#allocation2 + $0x31]]
    %v269 = vstv %s268
    %v270 = vadd.f32 %v266, %v269
    %v271 = vadd.f32 %v267, %v269
    %v272 = vmax.f32 %v270, 0.0
    %v273 = vmax.f32 %v271, 0.0
    %s274 = sld [smem:[#allocation2 + $0x12]]
    %v275 = vstv %s274
    %v276 = vmul.f32 %v275, %v56
    %v277 = vmul.f32 %v275, %v57
    %s278 = sld [smem:[#allocation2 + $0x1a]]
    %v279 = vstv %s278
    %v280 = vmul.f32 %v279, %v72
    %v281 = vmul.f32 %v279, %v73
    %v282 = vadd.f32 %v276, %v280
    %v283 = vadd.f32 %v277, %v281
    %s284 = sld [smem:[#allocation2 + $0x22]]
    %v285 = vstv %s284
    %v286 = vmul.f32 %v285, %v88
    %v287 = vmul.f32 %v285, %v89
    %v288 = vadd.f32 %v282, %v286
    %v289 = vadd.f32 %v283, %v287
    %s290 = sld [smem:[#allocation2 + $0x2a]]
    %v291 = vstv %s290
    %v292 = vmul.f32 %v291, %v104
    %v293 = vmul.f32 %v291, %v105
    %v294 = vadd.f32 %v288, %v292
    %v295 = vadd.f32 %v289, %v293
    %s296 = sld [smem:[#allocation2 + $0x32]]
    %v297 = vstv %s296
    %v298 = vadd.f32 %v294, %v297
    %v299 = vadd.f32 %v295, %v297
    %v300 = vmax.f32 %v298, 0.0
    %v301 = vmax.f32 %v299, 0.0
    %s302 = sld [smem:[#allocation2 + $0x13]]
    %v303 = vstv %s302
    %v304 = vmul.f32 %v303, %v56
    %v305 = vmul.f32 %v303, %v57
    %s306 = sld [smem:[#allocation2 + $0x1b]]
    %v307 = vstv %s306
    %v308 = vmul.f32 %v307, %v72
    %v309 = vmul.f32 %v307, %v73
    %v310 = vadd.f32 %v304, %v308
    %v311 = vadd.f32 %v305, %v309
    %s312 = sld [smem:[#allocation2 + $0x23]]
    %v313 = vstv %s312
    %v314 = vmul.f32 %v313, %v88
    %v315 = vmul.f32 %v313, %v89
    %v316 = vadd.f32 %v310, %v314
    %v317 = vadd.f32 %v311, %v315
    %s318 = sld [smem:[#allocation2 + $0x2b]]
    %v319 = vstv %s318
    %v320 = vmul.f32 %v319, %v104
    %v321 = vmul.f32 %v319, %v105
    %v322 = vadd.f32 %v316, %v320
    %v323 = vadd.f32 %v317, %v321
    %s324 = sld [smem:[#allocation2 + $0x33]]
    %v325 = vstv %s324
    %v326 = vadd.f32 %v322, %v325
    %v327 = vadd.f32 %v323, %v325
    %v328 = vmax.f32 %v326, 0.0
    %v329 = vmax.f32 %v327, 0.0
    %s330 = sld [smem:[#allocation2 + $0x34]]
    %v331 = vstv %s330
    %v332 = vmul.f32 %v331, %v132
    %v333 = vmul.f32 %v331, %v133
    %s334 = sld [smem:[#allocation2 + $0x35]]
    %v335 = vstv %s334
    %v336 = vmul.f32 %v335, %v160
    %v337 = vmul.f32 %v335, %v161
    %v338 = vadd.f32 %v332, %v336
    %v339 = vadd.f32 %v333, %v337
    %s340 = sld [smem:[#allocation2 + $0x36]]
    %v341 = vstv %s340
    %v342 = vmul.f32 %v341, %v188
    %v343 = vmul.f32 %v341, %v189
    %v344 = vadd.f32 %v338, %v342
    %v345 = vadd.f32 %v339, %v343
    %s346 = sld [smem:[#allocation2 + $0x37]]
    %v347 = vstv %s346
    %v348 = vmul.f32 %v347, %v216
    %v349 = vmul.f32 %v347, %v217
    %v350 = vadd.f32 %v344, %v348
    %v351 = vadd.f32 %v345, %v349
    %s352 = sld [smem:[#allocation2 + $0x38]]
    %v353 = vstv %s352
    %v354 = vmul.f32 %v353, %v244
    %v355 = vmul.f32 %v353, %v245
    %v356 = vadd.f32 %v350, %v354
    %v357 = vadd.f32 %v351, %v355
    %s358 = sld [smem:[#allocation2 + $0x39]]
    %v359 = vstv %s358
    %v360 = vmul.f32 %v359, %v272
    %v361 = vmul.f32 %v359, %v273
    %v362 = vadd.f32 %v356, %v360
    %v363 = vadd.f32 %v357, %v361
    %s364 = sld [smem:[#allocation2 + $0x3a]]
    %v365 = vstv %s364
    %v366 = vmul.f32 %v365, %v300
    %v367 = vmul.f32 %v365, %v301
    %v368 = vadd.f32 %v362, %v366
    %v369 = vadd.f32 %v363, %v367
    %s370 = sld [smem:[#allocation2 + $0x3b]]
    %v371 = vstv %s370
    %v372 = vmul.f32 %v371, %v328
    %v373 = vmul.f32 %v371, %v329
    %v374 = vadd.f32 %v368, %v372
    %v375 = vadd.f32 %v369, %v373
    %s376 = sld [smem:[#allocation2 + $0x3c]]
    %v377 = vstv %s376
    %v378 = vadd.f32 %v374, %v377
    %v379 = vadd.f32 %v375, %v377
    %v380 = vxor.u32 %v378, 2147483648
    %v381 = vxor.u32 %v379, 2147483648
    %v382 = vmul.f32 %v380, 1.442695
    %v383 = vpow.pop %v382
    %v384 = vmul.f32 %v381, 1.442695
    %v385 = vpow.pop %v384
    %v386 = vadd.f32 %v383, 1.0
    %v387 = vadd.f32 %v385, 1.0
    %v388 = vrcp.pop %v386
    %v389 = vmul.f32 1.0, %v388
    %v390 = vrcp.pop %v387
    %v391 = vmul.f32 1.0, %v390
    %392 = vst [vmem:[#allocation7] sm:$0xff] %v389
    %393 = vst [vmem:[#allocation7 + $0x8] sm:$0xff] %v391
    // Predicated region
    $region18: #{tpu_custom_call.1} parent=1 // pred_check
      _
    $region19: #{tpu_custom_call.1} parent=1 // pred_check_branch
      %395 = sbr.rel (0) target = $region21
    $region20: #{tpu_custom_call.1} parent=1 // pred_region
      %s397 = ssub.s32 256, 256
      %398 = vsyncadd [#allocation4], %s397
      %s399 = sshll.u32 [#allocation7], 4
      %s400 = int_to_ptr.vmem [resolvable:$true] %s399
      %405 = dma.vmem_to_hbm [thread:$0]  %s400, 256, %s2, [#allocation4], 128, 128, 8
    $region21: #{tpu_custom_call.1} parent=1 // pred_fallthru
      _
    // Predicated region
    $region22: #{tpu_custom_call.1} parent=1 // pred_check
      _
    $region23: #{tpu_custom_call.1} parent=1 // pred_check_branch
      %407 = sbr.rel (0) target = $region25
    $region24: #{tpu_custom_call.1} parent=1 // pred_region
      %408 = dma.done [#allocation4], 256
    $region25: #{tpu_custom_call.1} parent=1 // pred_fallthru
      _
    %409 = vsyncpa [#allocation3], 1
    %410 = vsyncpa [#allocation4], 1
    %411 = vsyncpa [#allocation5], 1

</llo_original>
